<compile_context>
chip_gen: v6e
topology: v6e:2x2x1
jax: 0.10.0
libtpu: 0.0.40
codegen_flags: <defaults>
</compile_context>

<pallas_src>
import math
import functools

import numpy as np
import jax
import jax.numpy as jnp
from jax.experimental import pallas as pl
from jax.experimental.pallas import tpu as pltpu

# ---- config (mirrors TransformerConfig) -------------------------------------
BATCH = 2
SEQ = 8
HIDDEN = 32
NUM_HEADS = 4
HEAD_SIZE = HIDDEN // NUM_HEADS
DROPOUT = 0.0  # eval-mode dropout == identity


def _self_attention_kernel(x_ref, p_ref, o_ref, *, batch, seq, hidden, num_heads):
    H = hidden
    E = H // num_heads
    BS = batch * seq

    # ---- unpack the parameter slab (static, sublane-tile-aligned slices) ----
    wq = p_ref[0 * H:1 * H, :]                 # (H, H), 1/sqrt(E) pre-folded
    wk = p_ref[1 * H:2 * H, :]
    wv = p_ref[2 * H:3 * H, :]
    wo = p_ref[3 * H:4 * H, :]
    bias = p_ref[4 * H:4 * H + 8, :]           # rows: bq*scale, bk, bv, bo, pad
    mask_rows = p_ref[4 * H + 8:4 * H + 8 + BS, :]
    neg_mask = mask_rows[:, 0:BS]              # (BS, BS) additive cross-batch mask

    # ---- fused full-width Q/K/V projections (three (BS,H)@(H,H) matmuls) ----
    q = jnp.dot(x_ref[0], wq, preferred_element_type=jnp.float32) + bias[0:1, :]
    k = jnp.dot(x_ref[1], wk, preferred_element_type=jnp.float32) + bias[1:2, :]
    v = jnp.dot(x_ref[2], wv, preferred_element_type=jnp.float32) + bias[2:3, :]

    # One transpose of k so every per-head score matmul has its contracting dim
    # on the rhs sublanes (no per-head XLU transposes).
    kT = jnp.transpose(k)                      # (H, BS)

    # ---- per-head attention; both batches share one (BS, BS) score matrix ----
    ctx_heads = []
    for n in range(num_heads):                 # static unroll, num_heads = 4
        q_n = q[:, n * E:(n + 1) * E]          # (BS, E)   lane slice
        kT_n = kT[n * E:(n + 1) * E, :]        # (E, BS)   sublane slice
        v_n = v[:, n * E:(n + 1) * E]          # (BS, E)
        s = jnp.dot(q_n, kT_n, preferred_element_type=jnp.float32) + neg_mask
        s = s - jnp.max(s, axis=-1, keepdims=True)
        p = jnp.exp(s)
        p = p * pl.reciprocal(jnp.sum(p, axis=-1, keepdims=True), approx=True)
        ctx_heads.append(jnp.dot(p, v_n, preferred_element_type=jnp.float32))
    ctx = jnp.concatenate(ctx_heads, axis=-1)  # (BS, H)   one lane concat

    # ---- fused output projection + single full-block store ----
    out = jnp.dot(ctx, wo, preferred_element_type=jnp.float32) + bias[3:4, :]
    o_ref[...] = out.reshape(batch, seq, H).astype(o_ref.dtype)


def prepare_params(params, batch=BATCH, seq=SEQ):
    """Pack all weights/biases + the cross-batch mask into one f32 slab.

    Call ONCE per parameter set; the slab is reused by every forward call so the
    per-call path is pure DMA-in + kernel (no per-call weight plumbing).

    Slab layout (rows x HIDDEN lanes):
      [0:H)        wq * 1/sqrt(E)        [H:2H)   wk
      [2H:3H)      wv                    [3H:4H)  wo
      [4H:4H+8)    bias rows: bq*scale, bk, bv, bo, 4 zero-pad rows
      [4H+8:4H+8+B*S)  additive cross-batch score mask (lanes [0:B*S) used)
    """
    H = HIDDEN
    BS = batch * seq
    assert BS <= H, "mask packing assumes B*S <= hidden_size for this toy config"
    scale = 1.0 / math.sqrt(HEAD_SIZE)

    bias = jnp.zeros((8, H), jnp.float32)
    bias = bias.at[0].set(params["bq"].reshape(H) * scale)
    bias = bias.at[1].set(params["bk"].reshape(H))
    bias = bias.at[2].set(params["bv"].reshape(H))
    bias = bias.at[3].set(params["bo"].reshape(H))

    bid = np.arange(BS) // seq
    mask = np.where(bid[:, None] == bid[None, :], 0.0, -1e30).astype(np.float32)
    mask = np.pad(mask, ((0, 0), (0, H - BS)), constant_values=-1e30)

    return jnp.concatenate(
        [params["wq"] * scale, params["wk"], params["wv"], params["wo"],
         bias, jnp.asarray(mask)],
        axis=0).astype(jnp.float32)            # (4H + 8 + B*S, H)


@jax.jit
def self_attention(query, key, value, param_slab):
    """query/key/value: (B, S, H) float32. param_slab: output of prepare_params."""
    B, S, H = query.shape
    BS = B * S
    x = jnp.stack([query.reshape(BS, H), key.reshape(BS, H), value.reshape(BS, H)])

    flops = (3 * 2 * BS * H * H                           # fused QKV projections
             + NUM_HEADS * 2 * 2 * BS * BS * HEAD_SIZE    # scores + probs @ v
             + 2 * BS * H * H)                            # output projection
    cost = pl.CostEstimate(flops=flops,
                           transcendentals=NUM_HEADS * BS * BS,
                           bytes_accessed=4 * (x.size + param_slab.size + BS * H))

    vmem_spec = pl.BlockSpec(memory_space=pltpu.MemorySpace.VMEM)
    kernel = functools.partial(_self_attention_kernel, batch=B, seq=S,
                               hidden=H, num_heads=NUM_HEADS)

    return pl.pallas_call(
        kernel,
        out_shape=jax.ShapeDtypeStruct((B, S, H), query.dtype),
        in_specs=[vmem_spec, vmem_spec],
        out_specs=vmem_spec,
        cost_estimate=cost,
    )(x, param_slab)


def _init_params(key):
    """Deterministic init. Linear weights stored pre-transposed as (in, out)."""
    ks = jax.random.split(key, 8)
    bound = 1.0 / math.sqrt(HIDDEN)

    def lin(kw, kb):
        w = jax.random.uniform(kw, (HIDDEN, HIDDEN), jnp.float32, -bound, bound)
        b = jax.random.uniform(kb, (1, HIDDEN), jnp.float32, -bound, bound)
        return w, b

    wq, bq = lin(ks[0], ks[1])
    wk, bk = lin(ks[2], ks[3])
    wv, bv = lin(ks[4], ks[5])
    wo, bo = lin(ks[6], ks[7])
    return dict(wq=wq, bq=bq, wk=wk, bk=bk, wv=wv, bv=bv, wo=wo, bo=bo)


def _reference(query, key, value, p):
    """Pure-JAX reference mirroring the PyTorch forward (no masks, eval dropout)."""
    B, S, H = query.shape
    q = query @ p["wq"] + p["bq"]
    k = key @ p["wk"] + p["bk"]
    v = value @ p["wv"] + p["bv"]

    def split(x):
        return x.reshape(B, S, NUM_HEADS, HEAD_SIZE).transpose(0, 2, 1, 3)

    qh, kh, vh = split(q), split(k), split(v)
    scores = jnp.einsum("bhte,bhse->bhts", qh, kh) / math.sqrt(HEAD_SIZE)
    probs = jax.nn.softmax(scores, axis=-1)
    ctx = jnp.einsum("bhts,bhse->bhte", probs, vh)
    ctx = ctx.transpose(0, 2, 1, 3).reshape(B, S, H)
    return ctx @ p["wo"] + p["bo"]


if __name__ == "__main__":
    root = jax.random.PRNGKey(0)
    k_q, k_k, k_v, k_p = jax.random.split(root, 4)

    query = jax.random.normal(k_q, (BATCH, SEQ, HIDDEN), jnp.float32)
    key = jax.random.normal(k_k, (BATCH, SEQ, HIDDEN), jnp.float32)
    value = jax.random.normal(k_v, (BATCH, SEQ, HIDDEN), jnp.float32)
    params = _init_params(k_p)

    # One-time parameter packing (hoisted out of the per-call path).
    slab = jax.block_until_ready(prepare_params(params))

    out = jax.block_until_ready(self_attention(query, key, value, slab))
    ref = _reference(query, key, value, params)

    assert out.shape == (BATCH, SEQ, HIDDEN)
    # approx=True reciprocal (EUP vrcp) slightly loosens agreement vs the f32 reference.
    assert jnp.allclose(out, ref, atol=1e-3, rtol=1e-3), "mismatch vs JAX reference"

    print("KERNEL_OK")
</pallas_src>

<mosaic_0001>
module attributes {stable_mosaic.version = 11 : i64} {
  func.func @_self_attention_kernel(%arg0: memref<3x16x32xf32, #tpu.memory_space<vmem>>, %arg1: memref<152x32xf32, #tpu.memory_space<vmem>>, %arg2: memref<2x8x32xf32, #tpu.memory_space<vmem>>) attributes {dimension_semantics = [], scalar_prefetch = 0 : i64, scratch_operands = 0 : i64, tpu.core_type = #tpu.core_type<tc>} {
    %c0 = arith.constant 0 : index
    %c0_0 = arith.constant 0 : index
    %0 = vector.load %arg1[%c0, %c0_0] : memref<152x32xf32, #tpu.memory_space<vmem>>, vector<32x32xf32>
    %c32 = arith.constant 32 : index
    %c0_1 = arith.constant 0 : index
    %1 = vector.load %arg1[%c32, %c0_1] : memref<152x32xf32, #tpu.memory_space<vmem>>, vector<32x32xf32>
    %c64 = arith.constant 64 : index
    %c0_2 = arith.constant 0 : index
    %2 = vector.load %arg1[%c64, %c0_2] : memref<152x32xf32, #tpu.memory_space<vmem>>, vector<32x32xf32>
    %c96 = arith.constant 96 : index
    %c0_3 = arith.constant 0 : index
    %3 = vector.load %arg1[%c96, %c0_3] : memref<152x32xf32, #tpu.memory_space<vmem>>, vector<32x32xf32>
    %c128 = arith.constant 128 : index
    %c0_4 = arith.constant 0 : index
    %4 = vector.load %arg1[%c128, %c0_4] : memref<152x32xf32, #tpu.memory_space<vmem>>, vector<8x32xf32>
    %c136 = arith.constant 136 : index
    %c0_5 = arith.constant 0 : index
    %5 = vector.load %arg1[%c136, %c0_5] : memref<152x32xf32, #tpu.memory_space<vmem>>, vector<16x32xf32>
    %6 = vector.extract_strided_slice %5 {offsets = [0, 0], sizes = [16, 16], strides = [1, 1]} : vector<16x32xf32> to vector<16x16xf32>
    %c0_6 = arith.constant 0 : index
    %c0_7 = arith.constant 0 : index
    %c0_8 = arith.constant 0 : index
    %7 = vector.load %arg0[%c0_6, %c0_7, %c0_8] : memref<3x16x32xf32, #tpu.memory_space<vmem>>, vector<1x16x32xf32>
    %8 = vector.shape_cast %7 : vector<1x16x32xf32> to vector<16x32xf32>
    %cst = arith.constant dense<0.000000e+00> : vector<16x32xf32>
    %9 = tpu.matmul %8, %0, %cst {dimension_numbers = #tpu.dot_dimension_numbers<[1], [0], [0], [1], [0, 0, 1, 1], [], []>} : vector<16x32xf32>, vector<32x32xf32>, vector<16x32xf32> -> vector<16x32xf32>
    %10 = vector.extract_strided_slice %4 {offsets = [0, 0], sizes = [1, 32], strides = [1, 1]} : vector<8x32xf32> to vector<1x32xf32>
    %11 = vector.broadcast %10 : vector<1x32xf32> to vector<16x32xf32>
    %12 = arith.addf %9, %11 : vector<16x32xf32>
    %c1 = arith.constant 1 : index
    %c0_9 = arith.constant 0 : index
    %c0_10 = arith.constant 0 : index
    %13 = vector.load %arg0[%c1, %c0_9, %c0_10] : memref<3x16x32xf32, #tpu.memory_space<vmem>>, vector<1x16x32xf32>
    %14 = vector.shape_cast %13 : vector<1x16x32xf32> to vector<16x32xf32>
    %cst_11 = arith.constant dense<0.000000e+00> : vector<16x32xf32>
    %15 = tpu.matmul %14, %1, %cst_11 {dimension_numbers = #tpu.dot_dimension_numbers<[1], [0], [0], [1], [0, 0, 1, 1], [], []>} : vector<16x32xf32>, vector<32x32xf32>, vector<16x32xf32> -> vector<16x32xf32>
    %16 = vector.extract_strided_slice %4 {offsets = [1, 0], sizes = [1, 32], strides = [1, 1]} : vector<8x32xf32> to vector<1x32xf32>
    %17 = vector.broadcast %16 : vector<1x32xf32> to vector<16x32xf32>
    %18 = arith.addf %15, %17 : vector<16x32xf32>
    %c2 = arith.constant 2 : index
    %c0_12 = arith.constant 0 : index
    %c0_13 = arith.constant 0 : index
    %19 = vector.load %arg0[%c2, %c0_12, %c0_13] : memref<3x16x32xf32, #tpu.memory_space<vmem>>, vector<1x16x32xf32>
    %20 = vector.shape_cast %19 : vector<1x16x32xf32> to vector<16x32xf32>
    %cst_14 = arith.constant dense<0.000000e+00> : vector<16x32xf32>
    %21 = tpu.matmul %20, %2, %cst_14 {dimension_numbers = #tpu.dot_dimension_numbers<[1], [0], [0], [1], [0, 0, 1, 1], [], []>} : vector<16x32xf32>, vector<32x32xf32>, vector<16x32xf32> -> vector<16x32xf32>
    %22 = vector.extract_strided_slice %4 {offsets = [2, 0], sizes = [1, 32], strides = [1, 1]} : vector<8x32xf32> to vector<1x32xf32>
    %23 = vector.broadcast %22 : vector<1x32xf32> to vector<16x32xf32>
    %24 = arith.addf %21, %23 : vector<16x32xf32>
    %25 = tpu.transpose %18, [1, 0] : vector<16x32xf32> -> vector<32x16xf32>
    %26 = vector.extract_strided_slice %12 {offsets = [0, 0], sizes = [16, 8], strides = [1, 1]} : vector<16x32xf32> to vector<16x8xf32>
    %27 = vector.extract_strided_slice %25 {offsets = [0, 0], sizes = [8, 16], strides = [1, 1]} : vector<32x16xf32> to vector<8x16xf32>
    %28 = vector.extract_strided_slice %24 {offsets = [0, 0], sizes = [16, 8], strides = [1, 1]} : vector<16x32xf32> to vector<16x8xf32>
    %cst_15 = arith.constant dense<0.000000e+00> : vector<16x16xf32>
    %29 = tpu.matmul %26, %27, %cst_15 {dimension_numbers = #tpu.dot_dimension_numbers<[1], [0], [0], [1], [0, 0, 1, 1], [], []>} : vector<16x8xf32>, vector<8x16xf32>, vector<16x16xf32> -> vector<16x16xf32>
    %30 = arith.addf %29, %6 : vector<16x16xf32>
    %cst_16 = arith.constant dense<0xFF800000> : vector<16xf32>
    %31 = vector.multi_reduction <maximumf>, %30, %cst_16 [1] : vector<16x16xf32> to vector<16xf32>
    %32 = vector.shape_cast %31 : vector<16xf32> to vector<16x1xf32>
    %33 = vector.broadcast %32 : vector<16x1xf32> to vector<16x16xf32>
    %34 = arith.subf %30, %33 : vector<16x16xf32>
    %35 = math.exp %34 : vector<16x16xf32>
    %cst_17 = arith.constant dense<0.000000e+00> : vector<16xf32>
    %36 = vector.multi_reduction <add>, %35, %cst_17 [1] : vector<16x16xf32> to vector<16xf32>
    %37 = vector.shape_cast %36 : vector<16xf32> to vector<16x1xf32>
    %38 = tpu.reciprocal %37 {approx = true} : vector<16x1xf32> -> vector<16x1xf32>
    %39 = vector.broadcast %38 : vector<16x1xf32> to vector<16x16xf32>
    %40 = arith.mulf %35, %39 : vector<16x16xf32>
    %cst_18 = arith.constant dense<0.000000e+00> : vector<16x8xf32>
    %41 = tpu.matmul %40, %28, %cst_18 {dimension_numbers = #tpu.dot_dimension_numbers<[1], [0], [0], [1], [0, 0, 1, 1], [], []>} : vector<16x16xf32>, vector<16x8xf32>, vector<16x8xf32> -> vector<16x8xf32>
    %42 = vector.extract_strided_slice %12 {offsets = [0, 8], sizes = [16, 8], strides = [1, 1]} : vector<16x32xf32> to vector<16x8xf32>
    %43 = vector.extract_strided_slice %25 {offsets = [8, 0], sizes = [8, 16], strides = [1, 1]} : vector<32x16xf32> to vector<8x16xf32>
    %44 = vector.extract_strided_slice %24 {offsets = [0, 8], sizes = [16, 8], strides = [1, 1]} : vector<16x32xf32> to vector<16x8xf32>
    %cst_19 = arith.constant dense<0.000000e+00> : vector<16x16xf32>
    %45 = tpu.matmul %42, %43, %cst_19 {dimension_numbers = #tpu.dot_dimension_numbers<[1], [0], [0], [1], [0, 0, 1, 1], [], []>} : vector<16x8xf32>, vector<8x16xf32>, vector<16x16xf32> -> vector<16x16xf32>
    %46 = arith.addf %45, %6 : vector<16x16xf32>
    %cst_20 = arith.constant dense<0xFF800000> : vector<16xf32>
    %47 = vector.multi_reduction <maximumf>, %46, %cst_20 [1] : vector<16x16xf32> to vector<16xf32>
    %48 = vector.shape_cast %47 : vector<16xf32> to vector<16x1xf32>
    %49 = vector.broadcast %48 : vector<16x1xf32> to vector<16x16xf32>
    %50 = arith.subf %46, %49 : vector<16x16xf32>
    %51 = math.exp %50 : vector<16x16xf32>
    %cst_21 = arith.constant dense<0.000000e+00> : vector<16xf32>
    %52 = vector.multi_reduction <add>, %51, %cst_21 [1] : vector<16x16xf32> to vector<16xf32>
    %53 = vector.shape_cast %52 : vector<16xf32> to vector<16x1xf32>
    %54 = tpu.reciprocal %53 {approx = true} : vector<16x1xf32> -> vector<16x1xf32>
    %55 = vector.broadcast %54 : vector<16x1xf32> to vector<16x16xf32>
    %56 = arith.mulf %51, %55 : vector<16x16xf32>
    %cst_22 = arith.constant dense<0.000000e+00> : vector<16x8xf32>
    %57 = tpu.matmul %56, %44, %cst_22 {dimension_numbers = #tpu.dot_dimension_numbers<[1], [0], [0], [1], [0, 0, 1, 1], [], []>} : vector<16x16xf32>, vector<16x8xf32>, vector<16x8xf32> -> vector<16x8xf32>
    %58 = vector.extract_strided_slice %12 {offsets = [0, 16], sizes = [16, 8], strides = [1, 1]} : vector<16x32xf32> to vector<16x8xf32>
    %59 = vector.extract_strided_slice %25 {offsets = [16, 0], sizes = [8, 16], strides = [1, 1]} : vector<32x16xf32> to vector<8x16xf32>
    %60 = vector.extract_strided_slice %24 {offsets = [0, 16], sizes = [16, 8], strides = [1, 1]} : vector<16x32xf32> to vector<16x8xf32>
    %cst_23 = arith.constant dense<0.000000e+00> : vector<16x16xf32>
    %61 = tpu.matmul %58, %59, %cst_23 {dimension_numbers = #tpu.dot_dimension_numbers<[1], [0], [0], [1], [0, 0, 1, 1], [], []>} : vector<16x8xf32>, vector<8x16xf32>, vector<16x16xf32> -> vector<16x16xf32>
    %62 = arith.addf %61, %6 : vector<16x16xf32>
    %cst_24 = arith.constant dense<0xFF800000> : vector<16xf32>
    %63 = vector.multi_reduction <maximumf>, %62, %cst_24 [1] : vector<16x16xf32> to vector<16xf32>
    %64 = vector.shape_cast %63 : vector<16xf32> to vector<16x1xf32>
    %65 = vector.broadcast %64 : vector<16x1xf32> to vector<16x16xf32>
    %66 = arith.subf %62, %65 : vector<16x16xf32>
    %67 = math.exp %66 : vector<16x16xf32>
    %cst_25 = arith.constant dense<0.000000e+00> : vector<16xf32>
    %68 = vector.multi_reduction <add>, %67, %cst_25 [1] : vector<16x16xf32> to vector<16xf32>
    %69 = vector.shape_cast %68 : vector<16xf32> to vector<16x1xf32>
    %70 = tpu.reciprocal %69 {approx = true} : vector<16x1xf32> -> vector<16x1xf32>
    %71 = vector.broadcast %70 : vector<16x1xf32> to vector<16x16xf32>
    %72 = arith.mulf %67, %71 : vector<16x16xf32>
    %cst_26 = arith.constant dense<0.000000e+00> : vector<16x8xf32>
    %73 = tpu.matmul %72, %60, %cst_26 {dimension_numbers = #tpu.dot_dimension_numbers<[1], [0], [0], [1], [0, 0, 1, 1], [], []>} : vector<16x16xf32>, vector<16x8xf32>, vector<16x8xf32> -> vector<16x8xf32>
    %74 = vector.extract_strided_slice %12 {offsets = [0, 24], sizes = [16, 8], strides = [1, 1]} : vector<16x32xf32> to vector<16x8xf32>
    %75 = vector.extract_strided_slice %25 {offsets = [24, 0], sizes = [8, 16], strides = [1, 1]} : vector<32x16xf32> to vector<8x16xf32>
    %76 = vector.extract_strided_slice %24 {offsets = [0, 24], sizes = [16, 8], strides = [1, 1]} : vector<16x32xf32> to vector<16x8xf32>
    %cst_27 = arith.constant dense<0.000000e+00> : vector<16x16xf32>
    %77 = tpu.matmul %74, %75, %cst_27 {dimension_numbers = #tpu.dot_dimension_numbers<[1], [0], [0], [1], [0, 0, 1, 1], [], []>} : vector<16x8xf32>, vector<8x16xf32>, vector<16x16xf32> -> vector<16x16xf32>
    %78 = arith.addf %77, %6 : vector<16x16xf32>
    %cst_28 = arith.constant dense<0xFF800000> : vector<16xf32>
    %79 = vector.multi_reduction <maximumf>, %78, %cst_28 [1] : vector<16x16xf32> to vector<16xf32>
    %80 = vector.shape_cast %79 : vector<16xf32> to vector<16x1xf32>
    %81 = vector.broadcast %80 : vector<16x1xf32> to vector<16x16xf32>
    %82 = arith.subf %78, %81 : vector<16x16xf32>
    %83 = math.exp %82 : vector<16x16xf32>
    %cst_29 = arith.constant dense<0.000000e+00> : vector<16xf32>
    %84 = vector.multi_reduction <add>, %83, %cst_29 [1] : vector<16x16xf32> to vector<16xf32>
    %85 = vector.shape_cast %84 : vector<16xf32> to vector<16x1xf32>
    %86 = tpu.reciprocal %85 {approx = true} : vector<16x1xf32> -> vector<16x1xf32>
    %87 = vector.broadcast %86 : vector<16x1xf32> to vector<16x16xf32>
    %88 = arith.mulf %83, %87 : vector<16x16xf32>
    %cst_30 = arith.constant dense<0.000000e+00> : vector<16x8xf32>
    %89 = tpu.matmul %88, %76, %cst_30 {dimension_numbers = #tpu.dot_dimension_numbers<[1], [0], [0], [1], [0, 0, 1, 1], [], []>} : vector<16x16xf32>, vector<16x8xf32>, vector<16x8xf32> -> vector<16x8xf32>
    %90 = tpu.concatenate %41, %57, %73, %89 in 1 : vector<16x8xf32>, vector<16x8xf32>, vector<16x8xf32>, vector<16x8xf32> -> vector<16x32xf32>
    %cst_31 = arith.constant dense<0.000000e+00> : vector<16x32xf32>
    %91 = tpu.matmul %90, %3, %cst_31 {dimension_numbers = #tpu.dot_dimension_numbers<[1], [0], [0], [1], [0, 0, 1, 1], [], []>} : vector<16x32xf32>, vector<32x32xf32>, vector<16x32xf32> -> vector<16x32xf32>
    %92 = vector.extract_strided_slice %4 {offsets = [3, 0], sizes = [1, 32], strides = [1, 1]} : vector<8x32xf32> to vector<1x32xf32>
    %93 = vector.broadcast %92 : vector<1x32xf32> to vector<16x32xf32>
    %94 = arith.addf %91, %93 : vector<16x32xf32>
    %95 = vector.shape_cast %94 : vector<16x32xf32> to vector<2x8x32xf32>
    %c0_32 = arith.constant 0 : index
    %c0_33 = arith.constant 0 : index
    %c0_34 = arith.constant 0 : index
    %96 = vector.load %arg2[%c0_32, %c0_33, %c0_34] : memref<2x8x32xf32, #tpu.memory_space<vmem>>, vector<2x8x32xf32>
    tpu.vector_store %arg2[%c0_32, %c0_33, %c0_34], %95 {strides = array<i32>} : memref<2x8x32xf32, #tpu.memory_space<vmem>>, vector<2x8x32xf32>,
    return
  }
}

</mosaic_0001>

<llo_original>
// kernel: self_attention.1
$region0: #{self_attention.1}
  #allocation0 [shape = 'u32[]', space=smem, size = 0x4, offset = 0x4, fixed_abs, tag = 'smem constant byte address 0x4 - core index']
  #allocation1 [shape = 'u32[144,128]{1,0:T(1,128)}', space=vmem, size = 0x12000, scoped, tag = 'internal scratch']
  %s0 = inlined_call_operand.vmem [shape: f32[3,16,32], index: 0, kind: input, shape index: {}]
  %s1 = inlined_call_operand.vmem [shape: f32[152,32], index: 1, kind: input, shape index: {}]
  %s2 = inlined_call_operand.hbm [shape: f32[2,8,32], index: 2, kind: output, shape index: {}]
  %s3 = sld [smem:[#allocation0]]
  $region18: #{self_attention.1} parent=0
    _
  %s5 = ssub.s32 1, %s3
  %s6 = scalar_select 0, %s5, %s3
  $region1: #{self_attention.1} parent=0
    #allocation2 [shape = 'u8[8192]{0}', space=vmem, size = 0x2000, scoped, tag = 'output window, operand 0, single buffered']
    #allocation3 [shape = 's32[1]{0}', space=sflag, size = 0x4, scoped, tag = 'scoped memory for self_attention.1']
    %7 = vsyncpa [#allocation3], 0
    // Predicated region
    $region2: #{self_attention.1} parent=1 // pred_check
      _
    $region3: #{self_attention.1} parent=1 // pred_check_branch
      %9 = sbr.rel (0) target = $region5
    $region4: #{self_attention.1} parent=1 // pred_region
      _
    $region5: #{self_attention.1} parent=1 // pred_fallthru
      _
    // Predicated region
    $region6: #{self_attention.1} parent=1 // pred_check
      _
    $region7: #{self_attention.1} parent=1 // pred_check_branch
      %11 = sbr.rel (0) target = $region9
    $region8: #{self_attention.1} parent=1 // pred_region
      _
    $region9: #{self_attention.1} parent=1 // pred_fallthru
      _
    %v12 = vld [vmem:[%s1] sm:$0xff]
    %v13 = vld [vmem:[%s1 + $0x8] sm:$0xff]
    %v14 = vld [vmem:[%s1 + $0x10] sm:$0xff]
    %v15 = vld [vmem:[%s1 + $0x18] sm:$0xff]
    %v16 = vld [vmem:[%s1 + $0x20] sm:$0xff]
    %v17 = vld [vmem:[%s1 + $0x28] sm:$0xff]
    %v18 = vld [vmem:[%s1 + $0x30] sm:$0xff]
    %v19 = vld [vmem:[%s1 + $0x38] sm:$0xff]
    %v20 = vld [vmem:[%s1 + $0x40] sm:$0xff]
    %v21 = vld [vmem:[%s1 + $0x48] sm:$0xff]
    %v22 = vld [vmem:[%s1 + $0x50] sm:$0xff]
    %v23 = vld [vmem:[%s1 + $0x58] sm:$0xff]
    %v24 = vld [vmem:[%s1 + $0x60] sm:$0xff]
    %v25 = vld [vmem:[%s1 + $0x68] sm:$0xff]
    %v26 = vld [vmem:[%s1 + $0x70] sm:$0xff]
    %v27 = vld [vmem:[%s1 + $0x78] sm:$0xff]
    %v28 = vld [vmem:[%s1 + $0x80] sm:$0xff]
    %v29 = vld [vmem:[%s1 + $0x88] sm:$0xff]
    %v30 = vld [vmem:[%s1 + $0x90] sm:$0xff]
    %v31 = vld [vmem:[%s0] sm:$0xff]
    %v32 = vld [vmem:[%s0 + $0x8] sm:$0xff]
    %v33 = vlaneseq
    %v34 = vshrl.u32 %v33, 7
    %v35 = vsub.s32 0, %v34
    %v36 = vrot.slane %v28, %v35
    %vm37 = vcmask 261120
    %v39 = vsel %vm37, %v31, 0
    %v42 = vsel %vm37, %v32, 0
    %44 = vmatprep.subr.mxu0 0.0
    %45 = vmatpush1.msra.mxu0 0.0
    %46 = vmatprep.subr.mxu0 0.0
    %47 = vmatpush1.msra.mxu0 0.0
    %48 = vmatprep.subr.mxu0 0.0
    %49 = vmatpush1.msra.mxu0 0.0
    %50 = vmatprep.subr.mxu0 0.0
    %51 = vmatpush1.msra.mxu0 0.0
    %52 = vmatprep.subr.mxu0 0.0
    %53 = vmatpush1.msra.mxu0 0.0
    %54 = vmatprep.subr.mxu0 0.0
    %55 = vmatpush1.msra.mxu0 0.0
    %56 = vmatprep.subr.mxu0 0.0
    %57 = vmatpush1.msra.mxu0 0.0
    %58 = vmatprep.subr.mxu0 0.0
    %59 = vmatpush1.msra.mxu0 0.0
    %60 = vmatprep.subr.mxu0 0.0
    %61 = vmatpush1.msra.mxu0 0.0
    %62 = vmatprep.subr.mxu0 0.0
    %63 = vmatpush1.msra.mxu0 0.0
    %64 = vmatprep.subr.mxu0 0.0
    %65 = vmatpush1.msra.mxu0 0.0
    %66 = vmatprep.subr.mxu0 0.0
    %67 = vmatpush1.msra.mxu0 0.0
    %68 = vmatprep.subr.mxu0 0.0
    %69 = vmatpush1.msra.mxu0 %v15
    %70 = vmatprep.subr.mxu0 0.0
    %71 = vmatpush1.msra.mxu0 %v14
    %72 = vmatprep.subr.mxu0 0.0
    %73 = vmatpush1.msra.mxu0 %v13
    %74 = vmatprep.subr.mxu0 0.0
    %75 = vmatpush1.msra.mxu0 %v12
    %76 = vmatprep.subr.mxu0 0.0
    %77 = vmatpush2.msra.mxu0 0.0
    %78 = vmatprep.subr.mxu0 0.0
    %79 = vmatpush2.msra.mxu0 0.0
    %80 = vmatprep.subr.mxu0 0.0
    %81 = vmatpush2.msra.mxu0 0.0
    %82 = vmatprep.subr.mxu0 0.0
    %83 = vmatpush2.msra.mxu0 0.0
    %84 = vmatprep.subr.mxu0 0.0
    %85 = vmatpush2.msra.mxu0 0.0
    %86 = vmatprep.subr.mxu0 0.0
    %87 = vmatpush2.msra.mxu0 0.0
    %88 = vmatprep.subr.mxu0 0.0
    %89 = vmatpush2.msra.mxu0 0.0
    %90 = vmatprep.subr.mxu0 0.0
    %91 = vmatpush2.msra.mxu0 0.0
    %92 = vmatprep.subr.mxu0 0.0
    %93 = vmatpush2.msra.mxu0 0.0
    %94 = vmatprep.subr.mxu0 0.0
    %95 = vmatpush2.msra.mxu0 0.0
    %96 = vmatprep.subr.mxu0 0.0
    %97 = vmatpush2.msra.mxu0 0.0
    %98 = vmatprep.subr.mxu0 0.0
    %99 = vmatpush2.msra.mxu0 0.0
    %100 = vmatprep.subr.mxu0 0.0
    %101 = vmatpush2.msra.mxu0 0.0
    %102 = vmatprep.subr.mxu0 0.0
    %103 = vmatpush2.msra.mxu0 0.0
    %104 = vmatprep.subr.mxu0 0.0
    %105 = vmatpush2.msra.mxu0 0.0
    %106 = vmatprep.subr.mxu0 0.0
    %107 = vmatpush2.msra.mxu0 0.0
    %108 = vmatprep.mubr.f32.mxu0 0.0
    %109 = vmatmul.mubr.f32.gmra.mxu0 %v39
    %v110 = vpop.f32.mrf.mxu0
    %v111 = vadd.f32 %v36, %v110
    %v112 = vpop.f32.mrf.mxu0
    %113 = vmatprep.mubr.f32.mxu0 0.0
    %114 = vmatmul.mubr.f32.gmra.mxu0 %v42
    %v115 = vpop.f32.mrf.mxu0
    %v116 = vadd.f32 %v36, %v115
    %v117 = vpop.f32.mrf.mxu0
    %118 = vdwg.mxu0
    %s119 = scalar_lea.vmem %s0, 16
    %v120 = vld [vmem:[%s119] sm:$0xff]
    %v121 = vld [vmem:[%s119 + $0x8] sm:$0xff]
    %v122 = vlaneseq
    %v123 = vshrl.u32 %v122, 7
    %v124 = vsub.s32 1, %v123
    %v125 = vrot.slane %v28, %v124
    %v127 = vsel %vm37, %v120, 0
    %v130 = vsel %vm37, %v121, 0
    %132 = vmatprep.subr.mxu0 0.0
    %133 = vmatpush1.msra.mxu0 0.0
    %134 = vmatprep.subr.mxu0 0.0
    %135 = vmatpush1.msra.mxu0 0.0
    %136 = vmatprep.subr.mxu0 0.0
    %137 = vmatpush1.msra.mxu0 0.0
    %138 = vmatprep.subr.mxu0 0.0
    %139 = vmatpush1.msra.mxu0 0.0
    %140 = vmatprep.subr.mxu0 0.0
    %141 = vmatpush1.msra.mxu0 0.0
    %142 = vmatprep.subr.mxu0 0.0
    %143 = vmatpush1.msra.mxu0 0.0
    %144 = vmatprep.subr.mxu0 0.0
    %145 = vmatpush1.msra.mxu0 0.0
    %146 = vmatprep.subr.mxu0 0.0
    %147 = vmatpush1.msra.mxu0 0.0
    %148 = vmatprep.subr.mxu0 0.0
    %149 = vmatpush1.msra.mxu0 0.0
    %150 = vmatprep.subr.mxu0 0.0
    %151 = vmatpush1.msra.mxu0 0.0
    %152 = vmatprep.subr.mxu0 0.0
    %153 = vmatpush1.msra.mxu0 0.0
    %154 = vmatprep.subr.mxu0 0.0
    %155 = vmatpush1.msra.mxu0 0.0
    %156 = vmatprep.subr.mxu0 0.0
    %157 = vmatpush1.msra.mxu0 %v19
    %158 = vmatprep.subr.mxu0 0.0
    %159 = vmatpush1.msra.mxu0 %v18
    %160 = vmatprep.subr.mxu0 0.0
    %161 = vmatpush1.msra.mxu0 %v17
    %162 = vmatprep.subr.mxu0 0.0
    %163 = vmatpush1.msra.mxu0 %v16
    %164 = vmatprep.subr.mxu0 0.0
    %165 = vmatpush2.msra.mxu0 0.0
    %166 = vmatprep.subr.mxu0 0.0
    %167 = vmatpush2.msra.mxu0 0.0
    %168 = vmatprep.subr.mxu0 0.0
    %169 = vmatpush2.msra.mxu0 0.0
    %170 = vmatprep.subr.mxu0 0.0
    %171 = vmatpush2.msra.mxu0 0.0
    %172 = vmatprep.subr.mxu0 0.0
    %173 = vmatpush2.msra.mxu0 0.0
    %174 = vmatprep.subr.mxu0 0.0
    %175 = vmatpush2.msra.mxu0 0.0
    %176 = vmatprep.subr.mxu0 0.0
    %177 = vmatpush2.msra.mxu0 0.0
    %178 = vmatprep.subr.mxu0 0.0
    %179 = vmatpush2.msra.mxu0 0.0
    %180 = vmatprep.subr.mxu0 0.0
    %181 = vmatpush2.msra.mxu0 0.0
    %182 = vmatprep.subr.mxu0 0.0
    %183 = vmatpush2.msra.mxu0 0.0
    %184 = vmatprep.subr.mxu0 0.0
    %185 = vmatpush2.msra.mxu0 0.0
    %186 = vmatprep.subr.mxu0 0.0
    %187 = vmatpush2.msra.mxu0 0.0
    %188 = vmatprep.subr.mxu0 0.0
    %189 = vmatpush2.msra.mxu0 0.0
    %190 = vmatprep.subr.mxu0 0.0
    %191 = vmatpush2.msra.mxu0 0.0
    %192 = vmatprep.subr.mxu0 0.0
    %193 = vmatpush2.msra.mxu0 0.0
    %194 = vmatprep.subr.mxu0 0.0
    %195 = vmatpush2.msra.mxu0 0.0
    %196 = vmatprep.mubr.f32.mxu0 0.0
    %197 = vmatmul.mubr.f32.gmra.mxu0 %v127
    %v198 = vpop.f32.mrf.mxu0
    %v199 = vadd.f32 %v125, %v198
    %v200 = vpop.f32.mrf.mxu0
    %201 = vmatprep.mubr.f32.mxu0 0.0
    %202 = vmatmul.mubr.f32.gmra.mxu0 %v130
    %v203 = vpop.f32.mrf.mxu0
    %v204 = vadd.f32 %v125, %v203
    %v205 = vpop.f32.mrf.mxu0
    %206 = vdwg.mxu0
    %s207 = scalar_lea.vmem %s0, 32
    %v208 = vld [vmem:[%s207] sm:$0xff]
    %v209 = vld [vmem:[%s207 + $0x8] sm:$0xff]
    %v210 = vlaneseq
    %v211 = vshrl.u32 %v210, 7
    %v212 = vsub.s32 2, %v211
    %v213 = vrot.slane %v28, %v212
    %v215 = vsel %vm37, %v208, 0
    %v218 = vsel %vm37, %v209, 0
    %220 = vmatprep.subr.mxu0 0.0
    %221 = vmatpush1.msra.mxu0 0.0
    %222 = vmatprep.subr.mxu0 0.0
    %223 = vmatpush1.msra.mxu0 0.0
    %224 = vmatprep.subr.mxu0 0.0
    %225 = vmatpush1.msra.mxu0 0.0
    %226 = vmatprep.subr.mxu0 0.0
    %227 = vmatpush1.msra.mxu0 0.0
    %228 = vmatprep.subr.mxu0 0.0
    %229 = vmatpush1.msra.mxu0 0.0
    %230 = vmatprep.subr.mxu0 0.0
    %231 = vmatpush1.msra.mxu0 0.0
    %232 = vmatprep.subr.mxu0 0.0
    %233 = vmatpush1.msra.mxu0 0.0
    %234 = vmatprep.subr.mxu0 0.0
    %235 = vmatpush1.msra.mxu0 0.0
    %236 = vmatprep.subr.mxu0 0.0
    %237 = vmatpush1.msra.mxu0 0.0
    %238 = vmatprep.subr.mxu0 0.0
    %239 = vmatpush1.msra.mxu0 0.0
    %240 = vmatprep.subr.mxu0 0.0
    %241 = vmatpush1.msra.mxu0 0.0
    %242 = vmatprep.subr.mxu0 0.0
    %243 = vmatpush1.msra.mxu0 0.0
    %244 = vmatprep.subr.mxu0 0.0
    %245 = vmatpush1.msra.mxu0 %v23
    %246 = vmatprep.subr.mxu0 0.0
    %247 = vmatpush1.msra.mxu0 %v22
    %248 = vmatprep.subr.mxu0 0.0
    %249 = vmatpush1.msra.mxu0 %v21
    %250 = vmatprep.subr.mxu0 0.0
    %251 = vmatpush1.msra.mxu0 %v20
    %252 = vmatprep.subr.mxu0 0.0
    %253 = vmatpush2.msra.mxu0 0.0
    %254 = vmatprep.subr.mxu0 0.0
    %255 = vmatpush2.msra.mxu0 0.0
    %256 = vmatprep.subr.mxu0 0.0
    %257 = vmatpush2.msra.mxu0 0.0
    %258 = vmatprep.subr.mxu0 0.0
    %259 = vmatpush2.msra.mxu0 0.0
    %260 = vmatprep.subr.mxu0 0.0
    %261 = vmatpush2.msra.mxu0 0.0
    %262 = vmatprep.subr.mxu0 0.0
    %263 = vmatpush2.msra.mxu0 0.0
    %264 = vmatprep.subr.mxu0 0.0
    %265 = vmatpush2.msra.mxu0 0.0
    %266 = vmatprep.subr.mxu0 0.0
    %267 = vmatpush2.msra.mxu0 0.0
    %268 = vmatprep.subr.mxu0 0.0
    %269 = vmatpush2.msra.mxu0 0.0
    %270 = vmatprep.subr.mxu0 0.0
    %271 = vmatpush2.msra.mxu0 0.0
    %272 = vmatprep.subr.mxu0 0.0
    %273 = vmatpush2.msra.mxu0 0.0
    %274 = vmatprep.subr.mxu0 0.0
    %275 = vmatpush2.msra.mxu0 0.0
    %276 = vmatprep.subr.mxu0 0.0
    %277 = vmatpush2.msra.mxu0 0.0
    %278 = vmatprep.subr.mxu0 0.0
    %279 = vmatpush2.msra.mxu0 0.0
    %280 = vmatprep.subr.mxu0 0.0
    %281 = vmatpush2.msra.mxu0 0.0
    %282 = vmatprep.subr.mxu0 0.0
    %283 = vmatpush2.msra.mxu0 0.0
    %284 = vmatprep.mubr.f32.mxu0 0.0
    %285 = vmatmul.mubr.f32.gmra.mxu0 %v215
    %v286 = vpop.f32.mrf.mxu0
    %v287 = vadd.f32 %v213, %v286
    %v288 = vpop.f32.mrf.mxu0
    %289 = vmatprep.mubr.f32.mxu0 0.0
    %290 = vmatmul.mubr.f32.gmra.mxu0 %v218
    %v291 = vpop.f32.mrf.mxu0
    %v292 = vadd.f32 %v213, %v291
    %v293 = vpop.f32.mrf.mxu0
    %294 = vdwg.mxu0
    %vm295 = vcmask 64512
    %v297 = vsel %vm295, %v111, 0
    %v300 = vsel %vm295, %v116, 0
    %v303 = vsel %vm295, %v199, 0
    %v306 = vsel %vm295, %v204, 0
    %308 = vmatprep.subr.mxu0 0.0
    %309 = vmatpush1.xpose.msra.mxu0 0.0
    %310 = vmatprep.subr.mxu0 0.0
    %311 = vmatpush1.xpose.msra.mxu0 0.0
    %312 = vmatprep.subr.mxu0 0.0
    %313 = vmatpush1.xpose.msra.mxu0 0.0
    %314 = vmatprep.subr.mxu0 0.0
    %315 = vmatpush1.xpose.msra.mxu0 0.0
    %316 = vmatprep.subr.mxu0 0.0
    %317 = vmatpush1.xpose.msra.mxu0 0.0
    %318 = vmatprep.subr.mxu0 0.0
    %319 = vmatpush1.xpose.msra.mxu0 0.0
    %320 = vmatprep.subr.mxu0 0.0
    %321 = vmatpush1.xpose.msra.mxu0 0.0
    %322 = vmatprep.subr.mxu0 0.0
    %323 = vmatpush1.xpose.msra.mxu0 0.0
    %324 = vmatprep.subr.mxu0 0.0
    %325 = vmatpush1.xpose.msra.mxu0 0.0
    %326 = vmatprep.subr.mxu0 0.0
    %327 = vmatpush1.xpose.msra.mxu0 0.0
    %328 = vmatprep.subr.mxu0 0.0
    %329 = vmatpush1.xpose.msra.mxu0 0.0
    %330 = vmatprep.subr.mxu0 0.0
    %331 = vmatpush1.xpose.msra.mxu0 0.0
    %332 = vmatprep.subr.mxu0 0.0
    %333 = vmatpush1.xpose.msra.mxu0 0.0
    %334 = vmatprep.subr.mxu0 0.0
    %335 = vmatpush1.xpose.msra.mxu0 0.0
    %336 = vmatprep.subr.mxu0 0.0
    %337 = vmatpush1.xpose.msra.mxu0 %v306
    %338 = vmatprep.subr.mxu0 0.0
    %339 = vmatpush1.xpose.msra.mxu0 %v303
    %340 = vmatprep.subr.mxu0 0.0
    %341 = vmatpush2.xpose.msra.mxu0 0.0
    %342 = vmatprep.subr.mxu0 0.0
    %343 = vmatpush2.xpose.msra.mxu0 0.0
    %344 = vmatprep.subr.mxu0 0.0
    %345 = vmatpush2.xpose.msra.mxu0 0.0
    %346 = vmatprep.subr.mxu0 0.0
    %347 = vmatpush2.xpose.msra.mxu0 0.0
    %348 = vmatprep.subr.mxu0 0.0
    %349 = vmatpush2.xpose.msra.mxu0 0.0
    %350 = vmatprep.subr.mxu0 0.0
    %351 = vmatpush2.xpose.msra.mxu0 0.0
    %352 = vmatprep.subr.mxu0 0.0
    %353 = vmatpush2.xpose.msra.mxu0 0.0
    %354 = vmatprep.subr.mxu0 0.0
    %355 = vmatpush2.xpose.msra.mxu0 0.0
    %356 = vmatprep.subr.mxu0 0.0
    %357 = vmatpush2.xpose.msra.mxu0 0.0
    %358 = vmatprep.subr.mxu0 0.0
    %359 = vmatpush2.xpose.msra.mxu0 0.0
    %360 = vmatprep.subr.mxu0 0.0
    %361 = vmatpush2.xpose.msra.mxu0 0.0
    %362 = vmatprep.subr.mxu0 0.0
    %363 = vmatpush2.xpose.msra.mxu0 0.0
    %364 = vmatprep.subr.mxu0 0.0
    %365 = vmatpush2.xpose.msra.mxu0 0.0
    %366 = vmatprep.subr.mxu0 0.0
    %367 = vmatpush2.xpose.msra.mxu0 0.0
    %368 = vmatprep.subr.mxu0 0.0
    %369 = vmatpush2.xpose.msra.mxu0 0.0
    %370 = vmatprep.subr.mxu0 0.0
    %371 = vmatpush2.xpose.msra.mxu0 0.0
    %372 = vmatprep.mubr.f32.mxu0 0.0
    %373 = vmatmul.mubr.f32.gmra.mxu0 %v297
    %v374 = vpop.f32.mrf.mxu0
    %v375 = vadd.f32 %v29, %v374
    %v376 = vpop.f32.mrf.mxu0
    %377 = vmatprep.mubr.f32.mxu0 0.0
    %378 = vmatmul.mubr.f32.gmra.mxu0 %v300
    %v379 = vpop.f32.mrf.mxu0
    %v380 = vadd.f32 %v30, %v379
    %v381 = vpop.f32.mrf.mxu0
    %382 = vdwg.mxu0
    %vm383 = vcmask 130048
    %v384 = vsel %vm383, %v375, -inf
    %385 = vmax.xlane.f32.xlu0 %v384
    %v386 = vpop.xlane.xlu0 %385
    %v387 = vsel %vm383, %v380, -inf
    %388 = vmax.xlane.f32.xlu0 %v387
    %v389 = vpop.xlane.xlu0 %388
    %v390 = vsub.f32 %v375, %v386
    %v391 = vsub.f32 %v380, %v389
    %v392 = vmul.f32 %v390, 1.442695
    %v393 = vpow.pop %v392
    %v394 = vmul.f32 %v391, 1.442695
    %v395 = vpow.pop %v394
    %v396 = vsel %vm383, %v393, 0.0
    %397 = vadd.xlane.f32.xlu0 %v396
    %v398 = vpop.xlane.xlu0 %397
    %v399 = vsel %vm383, %v395, 0.0
    %400 = vadd.xlane.f32.xlu0 %v399
    %v401 = vpop.xlane.xlu0 %400
    %v402 = vrcp.pop %v398
    %v403 = vrcp.pop %v401
    %v404 = vmul.f32 %v393, %v402
    %v405 = vmul.f32 %v395, %v403
    %v407 = vsel %vm383, %v404, 0
    %v410 = vsel %vm383, %v405, 0
    %412 = vmatprep.subr.mxu0 0.0
    %413 = vmatpush1.msra.mxu0 0.0
    %414 = vmatprep.subr.mxu0 0.0
    %415 = vmatpush1.msra.mxu0 0.0
    %416 = vmatprep.subr.mxu0 0.0
    %417 = vmatpush1.msra.mxu0 0.0
    %418 = vmatprep.subr.mxu0 0.0
    %419 = vmatpush1.msra.mxu0 0.0
    %420 = vmatprep.subr.mxu0 0.0
    %421 = vmatpush1.msra.mxu0 0.0
    %422 = vmatprep.subr.mxu0 0.0
    %423 = vmatpush1.msra.mxu0 0.0
    %424 = vmatprep.subr.mxu0 0.0
    %425 = vmatpush1.msra.mxu0 0.0
    %426 = vmatprep.subr.mxu0 0.0
    %427 = vmatpush1.msra.mxu0 0.0
    %428 = vmatprep.subr.mxu0 0.0
    %429 = vmatpush1.msra.mxu0 0.0
    %430 = vmatprep.subr.mxu0 0.0
    %431 = vmatpush1.msra.mxu0 0.0
    %432 = vmatprep.subr.mxu0 0.0
    %433 = vmatpush1.msra.mxu0 0.0
    %434 = vmatprep.subr.mxu0 0.0
    %435 = vmatpush1.msra.mxu0 0.0
    %436 = vmatprep.subr.mxu0 0.0
    %437 = vmatpush1.msra.mxu0 0.0
    %438 = vmatprep.subr.mxu0 0.0
    %439 = vmatpush1.msra.mxu0 0.0
    %440 = vmatprep.subr.mxu0 0.0
    %441 = vmatpush1.msra.mxu0 %v292
    %442 = vmatprep.subr.mxu0 0.0
    %443 = vmatpush1.msra.mxu0 %v287
    %444 = vmatprep.subr.mxu0 0.0
    %445 = vmatpush2.msra.mxu0 0.0
    %446 = vmatprep.subr.mxu0 0.0
    %447 = vmatpush2.msra.mxu0 0.0
    %448 = vmatprep.subr.mxu0 0.0
    %449 = vmatpush2.msra.mxu0 0.0
    %450 = vmatprep.subr.mxu0 0.0
    %451 = vmatpush2.msra.mxu0 0.0
    %452 = vmatprep.subr.mxu0 0.0
    %453 = vmatpush2.msra.mxu0 0.0
    %454 = vmatprep.subr.mxu0 0.0
    %455 = vmatpush2.msra.mxu0 0.0
    %456 = vmatprep.subr.mxu0 0.0
    %457 = vmatpush2.msra.mxu0 0.0
    %458 = vmatprep.subr.mxu0 0.0
    %459 = vmatpush2.msra.mxu0 0.0
    %460 = vmatprep.subr.mxu0 0.0
    %461 = vmatpush2.msra.mxu0 0.0
    %462 = vmatprep.subr.mxu0 0.0
    %463 = vmatpush2.msra.mxu0 0.0
    %464 = vmatprep.subr.mxu0 0.0
    %465 = vmatpush2.msra.mxu0 0.0
    %466 = vmatprep.subr.mxu0 0.0
    %467 = vmatpush2.msra.mxu0 0.0
    %468 = vmatprep.subr.mxu0 0.0
    %469 = vmatpush2.msra.mxu0 0.0
    %470 = vmatprep.subr.mxu0 0.0
    %471 = vmatpush2.msra.mxu0 0.0
    %472 = vmatprep.subr.mxu0 0.0
    %473 = vmatpush2.msra.mxu0 0.0
    %474 = vmatprep.subr.mxu0 0.0
    %475 = vmatpush2.msra.mxu0 0.0
    %476 = vmatprep.mubr.f32.mxu0 0.0
    %477 = vmatmul.mubr.f32.gmra.mxu0 %v407
    %v478 = vpop.f32.mrf.mxu0
    %v479 = vadd.f32 0.0, %v478
    %v480 = vpop.f32.mrf.mxu0
    %481 = vmatprep.mubr.f32.mxu0 0.0
    %482 = vmatmul.mubr.f32.gmra.mxu0 %v410
    %v483 = vpop.f32.mrf.mxu0
    %v484 = vadd.f32 0.0, %v483
    %v485 = vpop.f32.mrf.mxu0
    %486 = vdwg.mxu0
    %487 = vrot.lane.b32.xlu0 %v111, 120
    %v488 = vpop.permute.xlu0 %487
    %489 = vrot.lane.b32.xlu0 %v116, 120
    %v490 = vpop.permute.xlu0 %489
    %491 = vrot.lane.b32.xlu0 %v199, 120
    %v492 = vpop.permute.xlu0 %491
    %493 = vrot.lane.b32.xlu0 %v204, 120
    %v494 = vpop.permute.xlu0 %493
    %v495 = vsel %vm295, %v488, 0
    %v497 = vsel %vm295, %v490, 0
    %v499 = vsel %vm295, %v492, 0
    %v501 = vsel %vm295, %v494, 0
    %503 = vmatprep.subr.mxu0 0.0
    %504 = vmatpush1.xpose.msra.mxu0 0.0
    %505 = vmatprep.subr.mxu0 0.0
    %506 = vmatpush1.xpose.msra.mxu0 0.0
    %507 = vmatprep.subr.mxu0 0.0
    %508 = vmatpush1.xpose.msra.mxu0 0.0
    %509 = vmatprep.subr.mxu0 0.0
    %510 = vmatpush1.xpose.msra.mxu0 0.0
    %511 = vmatprep.subr.mxu0 0.0
    %512 = vmatpush1.xpose.msra.mxu0 0.0
    %513 = vmatprep.subr.mxu0 0.0
    %514 = vmatpush1.xpose.msra.mxu0 0.0
    %515 = vmatprep.subr.mxu0 0.0
    %516 = vmatpush1.xpose.msra.mxu0 0.0
    %517 = vmatprep.subr.mxu0 0.0
    %518 = vmatpush1.xpose.msra.mxu0 0.0
    %519 = vmatprep.subr.mxu0 0.0
    %520 = vmatpush1.xpose.msra.mxu0 0.0
    %521 = vmatprep.subr.mxu0 0.0
    %522 = vmatpush1.xpose.msra.mxu0 0.0
    %523 = vmatprep.subr.mxu0 0.0
    %524 = vmatpush1.xpose.msra.mxu0 0.0
    %525 = vmatprep.subr.mxu0 0.0
    %526 = vmatpush1.xpose.msra.mxu0 0.0
    %527 = vmatprep.subr.mxu0 0.0
    %528 = vmatpush1.xpose.msra.mxu0 0.0
    %529 = vmatprep.subr.mxu0 0.0
    %530 = vmatpush1.xpose.msra.mxu0 0.0
    %531 = vmatprep.subr.mxu0 0.0
    %532 = vmatpush1.xpose.msra.mxu0 %v501
    %533 = vmatprep.subr.mxu0 0.0
    %534 = vmatpush1.xpose.msra.mxu0 %v499
    %535 = vmatprep.subr.mxu0 0.0
    %536 = vmatpush2.xpose.msra.mxu0 0.0
    %537 = vmatprep.subr.mxu0 0.0
    %538 = vmatpush2.xpose.msra.mxu0 0.0
    %539 = vmatprep.subr.mxu0 0.0
    %540 = vmatpush2.xpose.msra.mxu0 0.0
    %541 = vmatprep.subr.mxu0 0.0
    %542 = vmatpush2.xpose.msra.mxu0 0.0
    %543 = vmatprep.subr.mxu0 0.0
    %544 = vmatpush2.xpose.msra.mxu0 0.0
    %545 = vmatprep.subr.mxu0 0.0
    %546 = vmatpush2.xpose.msra.mxu0 0.0
    %547 = vmatprep.subr.mxu0 0.0
    %548 = vmatpush2.xpose.msra.mxu0 0.0
    %549 = vmatprep.subr.mxu0 0.0
    %550 = vmatpush2.xpose.msra.mxu0 0.0
    %551 = vmatprep.subr.mxu0 0.0
    %552 = vmatpush2.xpose.msra.mxu0 0.0
    %553 = vmatprep.subr.mxu0 0.0
    %554 = vmatpush2.xpose.msra.mxu0 0.0
    %555 = vmatprep.subr.mxu0 0.0
    %556 = vmatpush2.xpose.msra.mxu0 0.0
    %557 = vmatprep.subr.mxu0 0.0
    %558 = vmatpush2.xpose.msra.mxu0 0.0
    %559 = vmatprep.subr.mxu0 0.0
    %560 = vmatpush2.xpose.msra.mxu0 0.0
    %561 = vmatprep.subr.mxu0 0.0
    %562 = vmatpush2.xpose.msra.mxu0 0.0
    %563 = vmatprep.subr.mxu0 0.0
    %564 = vmatpush2.xpose.msra.mxu0 0.0
    %565 = vmatprep.subr.mxu0 0.0
    %566 = vmatpush2.xpose.msra.mxu0 0.0
    %567 = vmatprep.mubr.f32.mxu0 0.0
    %568 = vmatmul.mubr.f32.gmra.mxu0 %v495
    %v569 = vpop.f32.mrf.mxu0
    %v570 = vadd.f32 %v29, %v569
    %v571 = vpop.f32.mrf.mxu0
    %572 = vmatprep.mubr.f32.mxu0 0.0
    %573 = vmatmul.mubr.f32.gmra.mxu0 %v497
    %v574 = vpop.f32.mrf.mxu0
    %v575 = vadd.f32 %v30, %v574
    %v576 = vpop.f32.mrf.mxu0
    %577 = vdwg.mxu0
    %v578 = vsel %vm383, %v570, -inf
    %579 = vmax.xlane.f32.xlu0 %v578
    %v580 = vpop.xlane.xlu0 %579
    %v581 = vsel %vm383, %v575, -inf
    %582 = vmax.xlane.f32.xlu0 %v581
    %v583 = vpop.xlane.xlu0 %582
    %v584 = vsub.f32 %v570, %v580
    %v585 = vsub.f32 %v575, %v583
    %v586 = vmul.f32 %v584, 1.442695
    %v587 = vpow.pop %v586
    %v588 = vmul.f32 %v585, 1.442695
    %v589 = vpow.pop %v588
    %v590 = vsel %vm383, %v587, 0.0
    %591 = vadd.xlane.f32.xlu0 %v590
    %v592 = vpop.xlane.xlu0 %591
    %v593 = vsel %vm383, %v589, 0.0
    %594 = vadd.xlane.f32.xlu0 %v593
    %v595 = vpop.xlane.xlu0 %594
    %v596 = vrcp.pop %v592
    %v597 = vrcp.pop %v595
    %v598 = vmul.f32 %v587, %v596
    %v599 = vmul.f32 %v589, %v597
    %602 = vrot.lane.b32.xlu0 %v287, 120
    %v603 = vpop.permute.xlu0 %602
    %604 = vrot.lane.b32.xlu0 %v292, 120
    %v605 = vpop.permute.xlu0 %604
    %v609 = vsel %vm383, %v598, 0
    %v612 = vsel %vm383, %v599, 0
    %614 = vmatprep.subr.mxu0 0.0
    %615 = vmatpush1.msra.mxu0 0.0
    %616 = vmatprep.subr.mxu0 0.0
    %617 = vmatpush1.msra.mxu0 0.0
    %618 = vmatprep.subr.mxu0 0.0
    %619 = vmatpush1.msra.mxu0 0.0
    %620 = vmatprep.subr.mxu0 0.0
    %621 = vmatpush1.msra.mxu0 0.0
    %622 = vmatprep.subr.mxu0 0.0
    %623 = vmatpush1.msra.mxu0 0.0
    %624 = vmatprep.subr.mxu0 0.0
    %625 = vmatpush1.msra.mxu0 0.0
    %626 = vmatprep.subr.mxu0 0.0
    %627 = vmatpush1.msra.mxu0 0.0
    %628 = vmatprep.subr.mxu0 0.0
    %629 = vmatpush1.msra.mxu0 0.0
    %630 = vmatprep.subr.mxu0 0.0
    %631 = vmatpush1.msra.mxu0 0.0
    %632 = vmatprep.subr.mxu0 0.0
    %633 = vmatpush1.msra.mxu0 0.0
    %634 = vmatprep.subr.mxu0 0.0
    %635 = vmatpush1.msra.mxu0 0.0
    %636 = vmatprep.subr.mxu0 0.0
    %637 = vmatpush1.msra.mxu0 0.0
    %638 = vmatprep.subr.mxu0 0.0
    %639 = vmatpush1.msra.mxu0 0.0
    %640 = vmatprep.subr.mxu0 0.0
    %641 = vmatpush1.msra.mxu0 0.0
    %642 = vmatprep.subr.mxu0 0.0
    %643 = vmatpush1.msra.mxu0 %v605
    %644 = vmatprep.subr.mxu0 0.0
    %645 = vmatpush1.msra.mxu0 %v603
    %646 = vmatprep.subr.mxu0 0.0
    %647 = vmatpush2.msra.mxu0 0.0
    %648 = vmatprep.subr.mxu0 0.0
    %649 = vmatpush2.msra.mxu0 0.0
    %650 = vmatprep.subr.mxu0 0.0
    %651 = vmatpush2.msra.mxu0 0.0
    %652 = vmatprep.subr.mxu0 0.0
    %653 = vmatpush2.msra.mxu0 0.0
    %654 = vmatprep.subr.mxu0 0.0
    %655 = vmatpush2.msra.mxu0 0.0
    %656 = vmatprep.subr.mxu0 0.0
    %657 = vmatpush2.msra.mxu0 0.0
    %658 = vmatprep.subr.mxu0 0.0
    %659 = vmatpush2.msra.mxu0 0.0
    %660 = vmatprep.subr.mxu0 0.0
    %661 = vmatpush2.msra.mxu0 0.0
    %662 = vmatprep.subr.mxu0 0.0
    %663 = vmatpush2.msra.mxu0 0.0
    %664 = vmatprep.subr.mxu0 0.0
    %665 = vmatpush2.msra.mxu0 0.0
    %666 = vmatprep.subr.mxu0 0.0
    %667 = vmatpush2.msra.mxu0 0.0
    %668 = vmatprep.subr.mxu0 0.0
    %669 = vmatpush2.msra.mxu0 0.0
    %670 = vmatprep.subr.mxu0 0.0
    %671 = vmatpush2.msra.mxu0 0.0
    %672 = vmatprep.subr.mxu0 0.0
    %673 = vmatpush2.msra.mxu0 0.0
    %674 = vmatprep.subr.mxu0 0.0
    %675 = vmatpush2.msra.mxu0 0.0
    %676 = vmatprep.subr.mxu0 0.0
    %677 = vmatpush2.msra.mxu0 0.0
    %678 = vmatprep.mubr.f32.mxu0 0.0
    %679 = vmatmul.mubr.f32.gmra.mxu0 %v609
    %v680 = vpop.f32.mrf.mxu0
    %v681 = vadd.f32 0.0, %v680
    %v682 = vpop.f32.mrf.mxu0
    %683 = vmatprep.mubr.f32.mxu0 0.0
    %684 = vmatmul.mubr.f32.gmra.mxu0 %v612
    %v685 = vpop.f32.mrf.mxu0
    %v686 = vadd.f32 0.0, %v685
    %v687 = vpop.f32.mrf.mxu0
    %688 = vdwg.mxu0
    %689 = vrot.lane.b32.xlu0 %v111, 112
    %v690 = vpop.permute.xlu0 %689
    %691 = vrot.lane.b32.xlu0 %v116, 112
    %v692 = vpop.permute.xlu0 %691
    %693 = vrot.lane.b32.xlu0 %v199, 112
    %v694 = vpop.permute.xlu0 %693
    %695 = vrot.lane.b32.xlu0 %v204, 112
    %v696 = vpop.permute.xlu0 %695
    %v697 = vsel %vm295, %v690, 0
    %v699 = vsel %vm295, %v692, 0
    %v701 = vsel %vm295, %v694, 0
    %v703 = vsel %vm295, %v696, 0
    %705 = vmatprep.subr.mxu0 0.0
    %706 = vmatpush1.xpose.msra.mxu0 0.0
    %707 = vmatprep.subr.mxu0 0.0
    %708 = vmatpush1.xpose.msra.mxu0 0.0
    %709 = vmatprep.subr.mxu0 0.0
    %710 = vmatpush1.xpose.msra.mxu0 0.0
    %711 = vmatprep.subr.mxu0 0.0
    %712 = vmatpush1.xpose.msra.mxu0 0.0
    %713 = vmatprep.subr.mxu0 0.0
    %714 = vmatpush1.xpose.msra.mxu0 0.0
    %715 = vmatprep.subr.mxu0 0.0
    %716 = vmatpush1.xpose.msra.mxu0 0.0
    %717 = vmatprep.subr.mxu0 0.0
    %718 = vmatpush1.xpose.msra.mxu0 0.0
    %719 = vmatprep.subr.mxu0 0.0
    %720 = vmatpush1.xpose.msra.mxu0 0.0
    %721 = vmatprep.subr.mxu0 0.0
    %722 = vmatpush1.xpose.msra.mxu0 0.0
    %723 = vmatprep.subr.mxu0 0.0
    %724 = vmatpush1.xpose.msra.mxu0 0.0
    %725 = vmatprep.subr.mxu0 0.0
    %726 = vmatpush1.xpose.msra.mxu0 0.0
    %727 = vmatprep.subr.mxu0 0.0
    %728 = vmatpush1.xpose.msra.mxu0 0.0
    %729 = vmatprep.subr.mxu0 0.0
    %730 = vmatpush1.xpose.msra.mxu0 0.0
    %731 = vmatprep.subr.mxu0 0.0
    %732 = vmatpush1.xpose.msra.mxu0 0.0
    %733 = vmatprep.subr.mxu0 0.0
    %734 = vmatpush1.xpose.msra.mxu0 %v703
    %735 = vmatprep.subr.mxu0 0.0
    %736 = vmatpush1.xpose.msra.mxu0 %v701
    %737 = vmatprep.subr.mxu0 0.0
    %738 = vmatpush2.xpose.msra.mxu0 0.0
    %739 = vmatprep.subr.mxu0 0.0
    %740 = vmatpush2.xpose.msra.mxu0 0.0
    %741 = vmatprep.subr.mxu0 0.0
    %742 = vmatpush2.xpose.msra.mxu0 0.0
    %743 = vmatprep.subr.mxu0 0.0
    %744 = vmatpush2.xpose.msra.mxu0 0.0
    %745 = vmatprep.subr.mxu0 0.0
    %746 = vmatpush2.xpose.msra.mxu0 0.0
    %747 = vmatprep.subr.mxu0 0.0
    %748 = vmatpush2.xpose.msra.mxu0 0.0
    %749 = vmatprep.subr.mxu0 0.0
    %750 = vmatpush2.xpose.msra.mxu0 0.0
    %751 = vmatprep.subr.mxu0 0.0
    %752 = vmatpush2.xpose.msra.mxu0 0.0
    %753 = vmatprep.subr.mxu0 0.0
    %754 = vmatpush2.xpose.msra.mxu0 0.0
    %755 = vmatprep.subr.mxu0 0.0
    %756 = vmatpush2.xpose.msra.mxu0 0.0
    %757 = vmatprep.subr.mxu0 0.0
    %758 = vmatpush2.xpose.msra.mxu0 0.0
    %759 = vmatprep.subr.mxu0 0.0
    %760 = vmatpush2.xpose.msra.mxu0 0.0
    %761 = vmatprep.subr.mxu0 0.0
    %762 = vmatpush2.xpose.msra.mxu0 0.0
    %763 = vmatprep.subr.mxu0 0.0
    %764 = vmatpush2.xpose.msra.mxu0 0.0
    %765 = vmatprep.subr.mxu0 0.0
    %766 = vmatpush2.xpose.msra.mxu0 0.0
    %767 = vmatprep.subr.mxu0 0.0
    %768 = vmatpush2.xpose.msra.mxu0 0.0
    %769 = vmatprep.mubr.f32.mxu0 0.0
    %770 = vmatmul.mubr.f32.gmra.mxu0 %v697
    %v771 = vpop.f32.mrf.mxu0
    %v772 = vadd.f32 %v29, %v771
    %v773 = vpop.f32.mrf.mxu0
    %774 = vmatprep.mubr.f32.mxu0 0.0
    %775 = vmatmul.mubr.f32.gmra.mxu0 %v699
    %v776 = vpop.f32.mrf.mxu0
    %v777 = vadd.f32 %v30, %v776
    %v778 = vpop.f32.mrf.mxu0
    %779 = vdwg.mxu0
    %v780 = vsel %vm383, %v772, -inf
    %781 = vmax.xlane.f32.xlu0 %v780
    %v782 = vpop.xlane.xlu0 %781
    %v783 = vsel %vm383, %v777, -inf
    %784 = vmax.xlane.f32.xlu0 %v783
    %v785 = vpop.xlane.xlu0 %784
    %v786 = vsub.f32 %v772, %v782
    %v787 = vsub.f32 %v777, %v785
    %v788 = vmul.f32 %v786, 1.442695
    %v789 = vpow.pop %v788
    %v790 = vmul.f32 %v787, 1.442695
    %v791 = vpow.pop %v790
    %v792 = vsel %vm383, %v789, 0.0
    %793 = vadd.xlane.f32.xlu0 %v792
    %v794 = vpop.xlane.xlu0 %793
    %v795 = vsel %vm383, %v791, 0.0
    %796 = vadd.xlane.f32.xlu0 %v795
    %v797 = vpop.xlane.xlu0 %796
    %v798 = vrcp.pop %v794
    %v799 = vrcp.pop %v797
    %v800 = vmul.f32 %v789, %v798
    %v801 = vmul.f32 %v791, %v799
    %802 = vrot.lane.b32.xlu0 %v287, 112
    %v803 = vpop.permute.xlu0 %802
    %804 = vrot.lane.b32.xlu0 %v292, 112
    %v805 = vpop.permute.xlu0 %804
    %v809 = vsel %vm383, %v800, 0
    %v812 = vsel %vm383, %v801, 0
    %814 = vmatprep.subr.mxu0 0.0
    %815 = vmatpush1.msra.mxu0 0.0
    %816 = vmatprep.subr.mxu0 0.0
    %817 = vmatpush1.msra.mxu0 0.0
    %818 = vmatprep.subr.mxu0 0.0
    %819 = vmatpush1.msra.mxu0 0.0
    %820 = vmatprep.subr.mxu0 0.0
    %821 = vmatpush1.msra.mxu0 0.0
    %822 = vmatprep.subr.mxu0 0.0
    %823 = vmatpush1.msra.mxu0 0.0
    %824 = vmatprep.subr.mxu0 0.0
    %825 = vmatpush1.msra.mxu0 0.0
    %826 = vmatprep.subr.mxu0 0.0
    %827 = vmatpush1.msra.mxu0 0.0
    %828 = vmatprep.subr.mxu0 0.0
    %829 = vmatpush1.msra.mxu0 0.0
    %830 = vmatprep.subr.mxu0 0.0
    %831 = vmatpush1.msra.mxu0 0.0
    %832 = vmatprep.subr.mxu0 0.0
    %833 = vmatpush1.msra.mxu0 0.0
    %834 = vmatprep.subr.mxu0 0.0
    %835 = vmatpush1.msra.mxu0 0.0
    %836 = vmatprep.subr.mxu0 0.0
    %837 = vmatpush1.msra.mxu0 0.0
    %838 = vmatprep.subr.mxu0 0.0
    %839 = vmatpush1.msra.mxu0 0.0
    %840 = vmatprep.subr.mxu0 0.0
    %841 = vmatpush1.msra.mxu0 0.0
    %842 = vmatprep.subr.mxu0 0.0
    %843 = vmatpush1.msra.mxu0 %v805
    %844 = vmatprep.subr.mxu0 0.0
    %845 = vmatpush1.msra.mxu0 %v803
    %846 = vmatprep.subr.mxu0 0.0
    %847 = vmatpush2.msra.mxu0 0.0
    %848 = vmatprep.subr.mxu0 0.0
    %849 = vmatpush2.msra.mxu0 0.0
    %850 = vmatprep.subr.mxu0 0.0
    %851 = vmatpush2.msra.mxu0 0.0
    %852 = vmatprep.subr.mxu0 0.0
    %853 = vmatpush2.msra.mxu0 0.0
    %854 = vmatprep.subr.mxu0 0.0
    %855 = vmatpush2.msra.mxu0 0.0
    %856 = vmatprep.subr.mxu0 0.0
    %857 = vmatpush2.msra.mxu0 0.0
    %858 = vmatprep.subr.mxu0 0.0
    %859 = vmatpush2.msra.mxu0 0.0
    %860 = vmatprep.subr.mxu0 0.0
    %861 = vmatpush2.msra.mxu0 0.0
    %862 = vmatprep.subr.mxu0 0.0
    %863 = vmatpush2.msra.mxu0 0.0
    %864 = vmatprep.subr.mxu0 0.0
    %865 = vmatpush2.msra.mxu0 0.0
    %866 = vmatprep.subr.mxu0 0.0
    %867 = vmatpush2.msra.mxu0 0.0
    %868 = vmatprep.subr.mxu0 0.0
    %869 = vmatpush2.msra.mxu0 0.0
    %870 = vmatprep.subr.mxu0 0.0
    %871 = vmatpush2.msra.mxu0 0.0
    %872 = vmatprep.subr.mxu0 0.0
    %873 = vmatpush2.msra.mxu0 0.0
    %874 = vmatprep.subr.mxu0 0.0
    %875 = vmatpush2.msra.mxu0 0.0
    %876 = vmatprep.subr.mxu0 0.0
    %877 = vmatpush2.msra.mxu0 0.0
    %878 = vmatprep.mubr.f32.mxu0 0.0
    %879 = vmatmul.mubr.f32.gmra.mxu0 %v809
    %v880 = vpop.f32.mrf.mxu0
    %v881 = vadd.f32 0.0, %v880
    %v882 = vpop.f32.mrf.mxu0
    %883 = vmatprep.mubr.f32.mxu0 0.0
    %884 = vmatmul.mubr.f32.gmra.mxu0 %v812
    %v885 = vpop.f32.mrf.mxu0
    %v886 = vadd.f32 0.0, %v885
    %v887 = vpop.f32.mrf.mxu0
    %888 = vdwg.mxu0
    %889 = vrot.lane.b32.xlu0 %v111, 104
    %v890 = vpop.permute.xlu0 %889
    %891 = vrot.lane.b32.xlu0 %v116, 104
    %v892 = vpop.permute.xlu0 %891
    %893 = vrot.lane.b32.xlu0 %v199, 104
    %v894 = vpop.permute.xlu0 %893
    %895 = vrot.lane.b32.xlu0 %v204, 104
    %v896 = vpop.permute.xlu0 %895
    %v897 = vsel %vm295, %v890, 0
    %v899 = vsel %vm295, %v892, 0
    %v901 = vsel %vm295, %v894, 0
    %v903 = vsel %vm295, %v896, 0
    %905 = vmatprep.subr.mxu0 0.0
    %906 = vmatpush1.xpose.msra.mxu0 0.0
    %907 = vmatprep.subr.mxu0 0.0
    %908 = vmatpush1.xpose.msra.mxu0 0.0
    %909 = vmatprep.subr.mxu0 0.0
    %910 = vmatpush1.xpose.msra.mxu0 0.0
    %911 = vmatprep.subr.mxu0 0.0
    %912 = vmatpush1.xpose.msra.mxu0 0.0
    %913 = vmatprep.subr.mxu0 0.0
    %914 = vmatpush1.xpose.msra.mxu0 0.0
    %915 = vmatprep.subr.mxu0 0.0
    %916 = vmatpush1.xpose.msra.mxu0 0.0
    %917 = vmatprep.subr.mxu0 0.0
    %918 = vmatpush1.xpose.msra.mxu0 0.0
    %919 = vmatprep.subr.mxu0 0.0
    %920 = vmatpush1.xpose.msra.mxu0 0.0
    %921 = vmatprep.subr.mxu0 0.0
    %922 = vmatpush1.xpose.msra.mxu0 0.0
    %923 = vmatprep.subr.mxu0 0.0
    %924 = vmatpush1.xpose.msra.mxu0 0.0
    %925 = vmatprep.subr.mxu0 0.0
    %926 = vmatpush1.xpose.msra.mxu0 0.0
    %927 = vmatprep.subr.mxu0 0.0
    %928 = vmatpush1.xpose.msra.mxu0 0.0
    %929 = vmatprep.subr.mxu0 0.0
    %930 = vmatpush1.xpose.msra.mxu0 0.0
    %931 = vmatprep.subr.mxu0 0.0
    %932 = vmatpush1.xpose.msra.mxu0 0.0
    %933 = vmatprep.subr.mxu0 0.0
    %934 = vmatpush1.xpose.msra.mxu0 %v903
    %935 = vmatprep.subr.mxu0 0.0
    %936 = vmatpush1.xpose.msra.mxu0 %v901
    %937 = vmatprep.subr.mxu0 0.0
    %938 = vmatpush2.xpose.msra.mxu0 0.0
    %939 = vmatprep.subr.mxu0 0.0
    %940 = vmatpush2.xpose.msra.mxu0 0.0
    %941 = vmatprep.subr.mxu0 0.0
    %942 = vmatpush2.xpose.msra.mxu0 0.0
    %943 = vmatprep.subr.mxu0 0.0
    %944 = vmatpush2.xpose.msra.mxu0 0.0
    %945 = vmatprep.subr.mxu0 0.0
    %946 = vmatpush2.xpose.msra.mxu0 0.0
    %947 = vmatprep.subr.mxu0 0.0
    %948 = vmatpush2.xpose.msra.mxu0 0.0
    %949 = vmatprep.subr.mxu0 0.0
    %950 = vmatpush2.xpose.msra.mxu0 0.0
    %951 = vmatprep.subr.mxu0 0.0
    %952 = vmatpush2.xpose.msra.mxu0 0.0
    %953 = vmatprep.subr.mxu0 0.0
    %954 = vmatpush2.xpose.msra.mxu0 0.0
    %955 = vmatprep.subr.mxu0 0.0
    %956 = vmatpush2.xpose.msra.mxu0 0.0
    %957 = vmatprep.subr.mxu0 0.0
    %958 = vmatpush2.xpose.msra.mxu0 0.0
    %959 = vmatprep.subr.mxu0 0.0
    %960 = vmatpush2.xpose.msra.mxu0 0.0
    %961 = vmatprep.subr.mxu0 0.0
    %962 = vmatpush2.xpose.msra.mxu0 0.0
    %963 = vmatprep.subr.mxu0 0.0
    %964 = vmatpush2.xpose.msra.mxu0 0.0
    %965 = vmatprep.subr.mxu0 0.0
    %966 = vmatpush2.xpose.msra.mxu0 0.0
    %967 = vmatprep.subr.mxu0 0.0
    %968 = vmatpush2.xpose.msra.mxu0 0.0
    %969 = vmatprep.mubr.f32.mxu0 0.0
    %970 = vmatmul.mubr.f32.gmra.mxu0 %v897
    %v971 = vpop.f32.mrf.mxu0
    %v972 = vadd.f32 %v29, %v971
    %v973 = vpop.f32.mrf.mxu0
    %974 = vmatprep.mubr.f32.mxu0 0.0
    %975 = vmatmul.mubr.f32.gmra.mxu0 %v899
    %v976 = vpop.f32.mrf.mxu0
    %v977 = vadd.f32 %v30, %v976
    %v978 = vpop.f32.mrf.mxu0
    %979 = vdwg.mxu0
    %v980 = vsel %vm383, %v972, -inf
    %981 = vmax.xlane.f32.xlu0 %v980
    %v982 = vpop.xlane.xlu0 %981
    %v983 = vsel %vm383, %v977, -inf
    %984 = vmax.xlane.f32.xlu0 %v983
    %v985 = vpop.xlane.xlu0 %984
    %v986 = vsub.f32 %v972, %v982
    %v987 = vsub.f32 %v977, %v985
    %v988 = vmul.f32 %v986, 1.442695
    %v989 = vpow.pop %v988
    %v990 = vmul.f32 %v987, 1.442695
    %v991 = vpow.pop %v990
    %v992 = vsel %vm383, %v989, 0.0
    %993 = vadd.xlane.f32.xlu0 %v992
    %v994 = vpop.xlane.xlu0 %993
    %v995 = vsel %vm383, %v991, 0.0
    %996 = vadd.xlane.f32.xlu0 %v995
    %v997 = vpop.xlane.xlu0 %996
    %v998 = vrcp.pop %v994
    %v999 = vrcp.pop %v997
    %v1000 = vmul.f32 %v989, %v998
    %v1001 = vmul.f32 %v991, %v999
    %1002 = vrot.lane.b32.xlu0 %v287, 104
    %v1003 = vpop.permute.xlu0 %1002
    %1004 = vrot.lane.b32.xlu0 %v292, 104
    %v1005 = vpop.permute.xlu0 %1004
    %v1009 = vsel %vm383, %v1000, 0
    %v1012 = vsel %vm383, %v1001, 0
    %1014 = vmatprep.subr.mxu0 0.0
    %1015 = vmatpush1.msra.mxu0 0.0
    %1016 = vmatprep.subr.mxu0 0.0
    %1017 = vmatpush1.msra.mxu0 0.0
    %1018 = vmatprep.subr.mxu0 0.0
    %1019 = vmatpush1.msra.mxu0 0.0
    %1020 = vmatprep.subr.mxu0 0.0
    %1021 = vmatpush1.msra.mxu0 0.0
    %1022 = vmatprep.subr.mxu0 0.0
    %1023 = vmatpush1.msra.mxu0 0.0
    %1024 = vmatprep.subr.mxu0 0.0
    %1025 = vmatpush1.msra.mxu0 0.0
    %1026 = vmatprep.subr.mxu0 0.0
    %1027 = vmatpush1.msra.mxu0 0.0
    %1028 = vmatprep.subr.mxu0 0.0
    %1029 = vmatpush1.msra.mxu0 0.0
    %1030 = vmatprep.subr.mxu0 0.0
    %1031 = vmatpush1.msra.mxu0 0.0
    %1032 = vmatprep.subr.mxu0 0.0
    %1033 = vmatpush1.msra.mxu0 0.0
    %1034 = vmatprep.subr.mxu0 0.0
    %1035 = vmatpush1.msra.mxu0 0.0
    %1036 = vmatprep.subr.mxu0 0.0
    %1037 = vmatpush1.msra.mxu0 0.0
    %1038 = vmatprep.subr.mxu0 0.0
    %1039 = vmatpush1.msra.mxu0 0.0
    %1040 = vmatprep.subr.mxu0 0.0
    %1041 = vmatpush1.msra.mxu0 0.0
    %1042 = vmatprep.subr.mxu0 0.0
    %1043 = vmatpush1.msra.mxu0 %v1005
    %1044 = vmatprep.subr.mxu0 0.0
    %1045 = vmatpush1.msra.mxu0 %v1003
    %1046 = vmatprep.subr.mxu0 0.0
    %1047 = vmatpush2.msra.mxu0 0.0
    %1048 = vmatprep.subr.mxu0 0.0
    %1049 = vmatpush2.msra.mxu0 0.0
    %1050 = vmatprep.subr.mxu0 0.0
    %1051 = vmatpush2.msra.mxu0 0.0
    %1052 = vmatprep.subr.mxu0 0.0
    %1053 = vmatpush2.msra.mxu0 0.0
    %1054 = vmatprep.subr.mxu0 0.0
    %1055 = vmatpush2.msra.mxu0 0.0
    %1056 = vmatprep.subr.mxu0 0.0
    %1057 = vmatpush2.msra.mxu0 0.0
    %1058 = vmatprep.subr.mxu0 0.0
    %1059 = vmatpush2.msra.mxu0 0.0
    %1060 = vmatprep.subr.mxu0 0.0
    %1061 = vmatpush2.msra.mxu0 0.0
    %1062 = vmatprep.subr.mxu0 0.0
    %1063 = vmatpush2.msra.mxu0 0.0
    %1064 = vmatprep.subr.mxu0 0.0
    %1065 = vmatpush2.msra.mxu0 0.0
    %1066 = vmatprep.subr.mxu0 0.0
    %1067 = vmatpush2.msra.mxu0 0.0
    %1068 = vmatprep.subr.mxu0 0.0
    %1069 = vmatpush2.msra.mxu0 0.0
    %1070 = vmatprep.subr.mxu0 0.0
    %1071 = vmatpush2.msra.mxu0 0.0
    %1072 = vmatprep.subr.mxu0 0.0
    %1073 = vmatpush2.msra.mxu0 0.0
    %1074 = vmatprep.subr.mxu0 0.0
    %1075 = vmatpush2.msra.mxu0 0.0
    %1076 = vmatprep.subr.mxu0 0.0
    %1077 = vmatpush2.msra.mxu0 0.0
    %1078 = vmatprep.mubr.f32.mxu0 0.0
    %1079 = vmatmul.mubr.f32.gmra.mxu0 %v1009
    %v1080 = vpop.f32.mrf.mxu0
    %v1081 = vadd.f32 0.0, %v1080
    %v1082 = vpop.f32.mrf.mxu0
    %1083 = vmatprep.mubr.f32.mxu0 0.0
    %1084 = vmatmul.mubr.f32.gmra.mxu0 %v1012
    %v1085 = vpop.f32.mrf.mxu0
    %v1086 = vadd.f32 0.0, %v1085
    %v1087 = vpop.f32.mrf.mxu0
    %1088 = vdwg.mxu0
    %1091 = vrot.lane.b32.xlu0 %v681, 8
    %v1092 = vpop.permute.xlu0 %1091
    %1093 = vrot.lane.b32.xlu0 %v686, 8
    %v1094 = vpop.permute.xlu0 %1093
    %1099 = vrot.lane.b32.xlu0 %v881, 16
    %v1100 = vpop.permute.xlu0 %1099
    %1101 = vrot.lane.b32.xlu0 %v886, 16
    %v1102 = vpop.permute.xlu0 %1101
    %1107 = vrot.lane.b32.xlu0 %v1081, 24
    %v1108 = vpop.permute.xlu0 %1107
    %1109 = vrot.lane.b32.xlu0 %v1086, 24
    %v1110 = vpop.permute.xlu0 %1109
    %v1113 = vsel %vm295, %v479, %v1092
    %v1114 = vsel %vm295, %v484, %v1094
    %v1115 = vsel %vm383, %v1113, %v1100
    %v1116 = vsel %vm383, %v1114, %v1102
    %vm1117 = vcmask 195584
    %v1118 = vsel %vm1117, %v1115, %v1108
    %v1119 = vsel %vm1117, %v1116, %v1110
    %v1120 = vlaneseq
    %v1121 = vshrl.u32 %v1120, 7
    %v1122 = vsub.s32 3, %v1121
    %v1123 = vrot.slane %v28, %v1122
    %v1125 = vsel %vm37, %v1118, 0
    %v1128 = vsel %vm37, %v1119, 0
    %1130 = vmatprep.subr.mxu0 0.0
    %1131 = vmatpush1.msra.mxu0 0.0
    %1132 = vmatprep.subr.mxu0 0.0
    %1133 = vmatpush1.msra.mxu0 0.0
    %1134 = vmatprep.subr.mxu0 0.0
    %1135 = vmatpush1.msra.mxu0 0.0
    %1136 = vmatprep.subr.mxu0 0.0
    %1137 = vmatpush1.msra.mxu0 0.0
    %1138 = vmatprep.subr.mxu0 0.0
    %1139 = vmatpush1.msra.mxu0 0.0
    %1140 = vmatprep.subr.mxu0 0.0
    %1141 = vmatpush1.msra.mxu0 0.0
    %1142 = vmatprep.subr.mxu0 0.0
    %1143 = vmatpush1.msra.mxu0 0.0
    %1144 = vmatprep.subr.mxu0 0.0
    %1145 = vmatpush1.msra.mxu0 0.0
    %1146 = vmatprep.subr.mxu0 0.0
    %1147 = vmatpush1.msra.mxu0 0.0
    %1148 = vmatprep.subr.mxu0 0.0
    %1149 = vmatpush1.msra.mxu0 0.0
    %1150 = vmatprep.subr.mxu0 0.0
    %1151 = vmatpush1.msra.mxu0 0.0
    %1152 = vmatprep.subr.mxu0 0.0
    %1153 = vmatpush1.msra.mxu0 0.0
    %1154 = vmatprep.subr.mxu0 0.0
    %1155 = vmatpush1.msra.mxu0 %v27
    %1156 = vmatprep.subr.mxu0 0.0
    %1157 = vmatpush1.msra.mxu0 %v26
    %1158 = vmatprep.subr.mxu0 0.0
    %1159 = vmatpush1.msra.mxu0 %v25
    %1160 = vmatprep.subr.mxu0 0.0
    %1161 = vmatpush1.msra.mxu0 %v24
    %1162 = vmatprep.subr.mxu0 0.0
    %1163 = vmatpush2.msra.mxu0 0.0
    %1164 = vmatprep.subr.mxu0 0.0
    %1165 = vmatpush2.msra.mxu0 0.0
    %1166 = vmatprep.subr.mxu0 0.0
    %1167 = vmatpush2.msra.mxu0 0.0
    %1168 = vmatprep.subr.mxu0 0.0
    %1169 = vmatpush2.msra.mxu0 0.0
    %1170 = vmatprep.subr.mxu0 0.0
    %1171 = vmatpush2.msra.mxu0 0.0
    %1172 = vmatprep.subr.mxu0 0.0
    %1173 = vmatpush2.msra.mxu0 0.0
    %1174 = vmatprep.subr.mxu0 0.0
    %1175 = vmatpush2.msra.mxu0 0.0
    %1176 = vmatprep.subr.mxu0 0.0
    %1177 = vmatpush2.msra.mxu0 0.0
    %1178 = vmatprep.subr.mxu0 0.0
    %1179 = vmatpush2.msra.mxu0 0.0
    %1180 = vmatprep.subr.mxu0 0.0
    %1181 = vmatpush2.msra.mxu0 0.0
    %1182 = vmatprep.subr.mxu0 0.0
    %1183 = vmatpush2.msra.mxu0 0.0
    %1184 = vmatprep.subr.mxu0 0.0
    %1185 = vmatpush2.msra.mxu0 0.0
    %1186 = vmatprep.subr.mxu0 0.0
    %1187 = vmatpush2.msra.mxu0 0.0
    %1188 = vmatprep.subr.mxu0 0.0
    %1189 = vmatpush2.msra.mxu0 0.0
    %1190 = vmatprep.subr.mxu0 0.0
    %1191 = vmatpush2.msra.mxu0 0.0
    %1192 = vmatprep.subr.mxu0 0.0
    %1193 = vmatpush2.msra.mxu0 0.0
    %1194 = vmatprep.mubr.f32.mxu0 0.0
    %1195 = vmatmul.mubr.f32.gmra.mxu0 %v1125
    %v1196 = vpop.f32.mrf.mxu0
    %v1197 = vadd.f32 %v1123, %v1196
    %v1198 = vpop.f32.mrf.mxu0
    %1199 = vmatprep.mubr.f32.mxu0 0.0
    %1200 = vmatmul.mubr.f32.gmra.mxu0 %v1128
    %v1201 = vpop.f32.mrf.mxu0
    %v1202 = vadd.f32 %v1123, %v1201
    %v1203 = vpop.f32.mrf.mxu0
    %1204 = vdwg.mxu0
    %1205 = vst.msk [vmem:[#allocation2] sm:$0xff] %vm37, %v1197
    %1206 = vst.msk [vmem:[#allocation2 + $0x8] sm:$0xff] %vm37, %v1202
    // Predicated region
    $region10: #{self_attention.1} parent=1 // pred_check
      _
    $region11: #{self_attention.1} parent=1 // pred_check_branch
      %1208 = sbr.rel (0) target = $region13
    $region12: #{self_attention.1} parent=1 // pred_region
      %s1210 = ssub.s32 256, 256
      %1211 = vsyncadd [#allocation3], %s1210
      %s1212 = sshll.u32 [#allocation2], 4
      %s1213 = int_to_ptr.vmem [resolvable:$true] %s1212
      %1218 = dma.vmem_to_hbm [thread:$0]  %s1213, 256, %s2, [#allocation3], 128, 128, 8
    $region13: #{self_attention.1} parent=1 // pred_fallthru
      _
    // Predicated region
    $region14: #{self_attention.1} parent=1 // pred_check
      _
    $region15: #{self_attention.1} parent=1 // pred_check_branch
      %1220 = sbr.rel (0) target = $region17
    $region16: #{self_attention.1} parent=1 // pred_region
      %1221 = dma.done [#allocation3], 256
    $region17: #{self_attention.1} parent=1 // pred_fallthru
      _
    %1222 = vsyncpa [#allocation3], 1

</llo_original>
